<compile_context>
chip_gen: v5e
topology: v5e:2x2
jax: 0.10.0
libtpu: 0.0.40
codegen_flags: <defaults>
</compile_context>

<pallas_src>
import jax
import jax.numpy as jnp
from jax.experimental import pallas as pl
from jax.experimental.pallas import tpu as pltpu


# ----------------------------------------------------------------------------
# Pallas kernel: fused 3-layer GCN + mean-pool + (folded) linear head
# ----------------------------------------------------------------------------
def gcn_kernel(a_ref, p_ref, x_ref,
               w1_ref, b1_ref, w2_ref, b2_ref, w3l_ref, bl_ref,
               out_ref):
    A = a_ref[...]                       # [N, N]      bf16 normalized adjacency
    x = x_ref[...]                       # [N, F_in]   bf16 node features

    # ---- gconv1 + relu, reordered: (A @ X) @ W1 + b1   (F_in < H) --------------
    ax = jnp.dot(A, x, preferred_element_type=jnp.float32)              # [N, F_in]
    h = jnp.dot(ax.astype(jnp.bfloat16), w1_ref[...],
                preferred_element_type=jnp.float32) + b1_ref[...]       # [N, H] f32
    h = jnp.maximum(h, 0.0)

    # ---- gconv2 + relu:  A @ (h @ W2) + b2 -------------------------------------
    h = jnp.dot(h.astype(jnp.bfloat16), w2_ref[...],
                preferred_element_type=jnp.float32)                     # [N, H]
    h = jnp.dot(A, h.astype(jnp.bfloat16),
                preferred_element_type=jnp.float32) + b2_ref[...]
    h = jnp.maximum(h, 0.0)

    # ---- gconv3 + global_mean_pool + Linear, head folded -----------------------
    #   P @ (A @ (h @ W3) + b3) @ W_lin + b_lin
    # = P @ (A @ (h @ (W3 @ W_lin))) + (b3 @ W_lin + b_lin)        (rows of P sum to 1)
    h = jnp.dot(h.astype(jnp.bfloat16), w3l_ref[...],
                preferred_element_type=jnp.float32)                     # [N, OUT_pad]
    h = jnp.dot(A, h.astype(jnp.bfloat16),
                preferred_element_type=jnp.float32)                     # [N, OUT_pad]

    # dropout(p=0.5): inference path (identity)
    # TODO(synk): training-mode dropout would need pltpu.prng_seed/prng_random_bits.

    pooled = jnp.dot(p_ref[...], h.astype(jnp.bfloat16),
                     preferred_element_type=jnp.float32)                # [G_pad, OUT_pad]
    out_ref[...] = pooled + bl_ref[...]                                 # lane-dense store


def _round_up(v, m):
    return ((v + m - 1) // m) * m


def gcn_forward(a_hat, pool_mat, x, params):
    """Run the fused GCN kernel.  Small shapes -> single grid point, all VMEM-resident."""
    N = a_hat.shape[0]
    G = pool_mat.shape[0]
    F_in = x.shape[1]
    H = params["w1"].shape[1]
    OUT_F = params["w_lin"].shape[1]

    # Lane/sublane-dense padding of the output path.
    G_pad = _round_up(max(G, 8), 8)
    OUT_pad = _round_up(max(OUT_F, 128), 128)

    # Fold the head in f32 (wrapper-side, outside the hot loop).
    w3l = params["w3"] @ params["w_lin"]                                  # [H, OUT_F]
    b_fused = params["b3"] @ params["w_lin"] + params["b_lin"]            # [1, OUT_F]

    w3l_p = jnp.zeros((H, OUT_pad), jnp.float32).at[:, :OUT_F].set(w3l)
    b_fused_p = jnp.zeros((1, OUT_pad), jnp.float32).at[:, :OUT_F].set(b_fused)
    pool_p = jnp.zeros((G_pad, N), jnp.float32).at[:G, :].set(pool_mat)

    # bf16 MXU operands (f32 accumulation inside the kernel; biases stay f32).
    a_bf = a_hat.astype(jnp.bfloat16)
    p_bf = pool_p.astype(jnp.bfloat16)
    x_bf = x.astype(jnp.bfloat16)
    w1_bf = params["w1"].astype(jnp.bfloat16)
    w2_bf = params["w2"].astype(jnp.bfloat16)
    w3l_bf = w3l_p.astype(jnp.bfloat16)
    b1 = params["b1"].astype(jnp.float32)
    b2 = params["b2"].astype(jnp.float32)

    flops = 2 * (N * N * F_in + N * F_in * H          # gconv1 (reordered)
                 + N * H * H + N * N * H              # gconv2
                 + N * H * OUT_pad + N * N * OUT_pad  # gconv3 (folded head)
                 + G_pad * N * OUT_pad)               # pooling
    bytes_accessed = (2 * (N * N + G_pad * N + N * F_in + F_in * H + H * H + H * OUT_pad)
                      + 4 * (2 * H + OUT_pad + G_pad * OUT_pad))

    vmem = pl.BlockSpec(memory_space=pltpu.MemorySpace.VMEM)
    operands = (a_bf, p_bf, x_bf, w1_bf, b1, w2_bf, b2, w3l_bf, b_fused_p)

    out_padded = pl.pallas_call(
        gcn_kernel,
        out_shape=jax.ShapeDtypeStruct((G_pad, OUT_pad), jnp.float32),
        in_specs=[vmem] * len(operands),
        out_specs=vmem,
        compiler_params=pltpu.CompilerParams(vmem_limit_bytes=64 * 1024 * 1024),
        cost_estimate=pl.CostEstimate(flops=flops, transcendentals=0,
                                      bytes_accessed=bytes_accessed),
    )(*operands)
    return out_padded[:G, :OUT_F]


# ----------------------------------------------------------------------------
# Plain-JAX glue: graph preprocessing + deterministic parameter init
# ----------------------------------------------------------------------------
def build_normalized_adjacency(edge_index, num_nodes):
    """Dense A_hat = D^-1/2 (A + I) D^-1/2 (PyG gcn_norm semantics).

    Assumes a deduplicated, self-loop-free edge list (as produced below); duplicate
    edges / pre-existing self loops would be double counted vs PyG.
    """
    src, dst = edge_index[0], edge_index[1]
    A = jnp.zeros((num_nodes, num_nodes), jnp.float32)
    A = A.at[dst, src].add(1.0)                            # message flows src -> dst
    A = A + jnp.eye(num_nodes, dtype=jnp.float32)          # add self loops
    deg = jnp.sum(A, axis=1)
    d_inv_sqrt = jnp.where(deg > 0, 1.0 / jnp.sqrt(deg), 0.0)
    return d_inv_sqrt[:, None] * A * d_inv_sqrt[None, :]


def build_pool_matrix(batch, num_graphs):
    """P[g, n] = 1 / |graph g| if batch[n] == g, else 0."""
    onehot = (batch[None, :] == jnp.arange(num_graphs)[:, None]).astype(jnp.float32)
    counts = jnp.maximum(jnp.sum(onehot, axis=1, keepdims=True), 1.0)
    return onehot / counts


def init_params(key, in_f, hidden, out_f):
    ks = jax.random.split(key, 8)
    scale = 0.1
    return {
        "w1": scale * jax.random.normal(ks[0], (in_f, hidden), jnp.float32),
        "b1": scale * jax.random.normal(ks[1], (1, hidden), jnp.float32),
        "w2": scale * jax.random.normal(ks[2], (hidden, hidden), jnp.float32),
        "b2": scale * jax.random.normal(ks[3], (1, hidden), jnp.float32),
        "w3": scale * jax.random.normal(ks[4], (hidden, hidden), jnp.float32),
        "b3": scale * jax.random.normal(ks[5], (1, hidden), jnp.float32),
        "w_lin": scale * jax.random.normal(ks[6], (hidden, out_f), jnp.float32),
        "b_lin": scale * jax.random.normal(ks[7], (1, out_f), jnp.float32),
    }


def gcn_reference(a_hat, pool_mat, x, p):
    """Pure-f32 JAX reference of the original (unfolded) forward pass."""
    h = jnp.maximum(a_hat @ (x @ p["w1"]) + p["b1"], 0.0)
    h = jnp.maximum(a_hat @ (h @ p["w2"]) + p["b2"], 0.0)
    h = a_hat @ (h @ p["w3"]) + p["b3"]
    pooled = pool_mat @ h
    return pooled @ p["w_lin"] + p["b_lin"]


# ----------------------------------------------------------------------------
if __name__ == "__main__":
    key = jax.random.PRNGKey(0)
    k_x, k_p = jax.random.split(key)

    # Small synthetic graph batch: 2 graphs of 8 nodes each (16 nodes total).
    N, IN_F, HIDDEN, OUT_F, G = 16, 8, 32, 4, 2

    # Node features.
    x = jax.random.normal(k_x, (N, IN_F), jnp.float32)

    # Bidirectional chain edges within each graph (dedup'd, no self loops).
    src, dst = [], []
    for g in range(G):
        base = g * (N // G)
        for i in range(N // G - 1):
            src += [base + i, base + i + 1]
            dst += [base + i + 1, base + i]
    edge_index = jnp.array([src, dst], dtype=jnp.int32)

    # Graph assignment per node.
    batch = jnp.repeat(jnp.arange(G, dtype=jnp.int32), N // G)

    a_hat = build_normalized_adjacency(edge_index, N)
    pool_mat = build_pool_matrix(batch, G)
    params = init_params(k_p, IN_F, HIDDEN, OUT_F)

    out = gcn_forward(a_hat, pool_mat, x, params)
    jax.block_until_ready(out)

    ref = gcn_reference(a_hat, pool_mat, x, params)
    assert out.shape == (G, OUT_F)
    # bf16 MXU inputs with f32 accumulation -> small rounding vs pure-f32 reference.
    assert jnp.allclose(out, ref, atol=2e-2, rtol=2e-2), "mismatch vs JAX reference"

    print("KERNEL_OK")
</pallas_src>

<mosaic_0001>
module attributes {stable_mosaic.version = 11 : i64} {
  func.func @gcn_kernel(%arg0: memref<16x16xbf16, #tpu.memory_space<vmem>>, %arg1: memref<8x16xbf16, #tpu.memory_space<vmem>>, %arg2: memref<16x8xbf16, #tpu.memory_space<vmem>>, %arg3: memref<8x32xbf16, #tpu.memory_space<vmem>>, %arg4: memref<1x32xf32, #tpu.memory_space<vmem>>, %arg5: memref<32x32xbf16, #tpu.memory_space<vmem>>, %arg6: memref<1x32xf32, #tpu.memory_space<vmem>>, %arg7: memref<32x128xbf16, #tpu.memory_space<vmem>>, %arg8: memref<1x128xf32, #tpu.memory_space<vmem>>, %arg9: memref<8x128xf32, #tpu.memory_space<vmem>>) attributes {dimension_semantics = [], scalar_prefetch = 0 : i64, scratch_operands = 0 : i64, tpu.core_type = #tpu.core_type<tc>} {
    %c0 = arith.constant 0 : index
    %c0_0 = arith.constant 0 : index
    %0 = vector.load %arg0[%c0, %c0_0] : memref<16x16xbf16, #tpu.memory_space<vmem>>, vector<16x16xbf16>
    %c0_1 = arith.constant 0 : index
    %c0_2 = arith.constant 0 : index
    %1 = vector.load %arg2[%c0_1, %c0_2] : memref<16x8xbf16, #tpu.memory_space<vmem>>, vector<16x8xbf16>
    %cst = arith.constant dense<0.000000e+00> : vector<16x8xf32>
    %2 = tpu.matmul %0, %1, %cst {dimension_numbers = #tpu.dot_dimension_numbers<[1], [0], [0], [1], [0, 0, 1, 1], [], []>} : vector<16x16xbf16>, vector<16x8xbf16>, vector<16x8xf32> -> vector<16x8xf32>
    %3 = arith.truncf %2 : vector<16x8xf32> to vector<16x8xbf16>
    %c0_3 = arith.constant 0 : index
    %c0_4 = arith.constant 0 : index
    %4 = vector.load %arg3[%c0_3, %c0_4] : memref<8x32xbf16, #tpu.memory_space<vmem>>, vector<8x32xbf16>
    %cst_5 = arith.constant dense<0.000000e+00> : vector<16x32xf32>
    %5 = tpu.matmul %3, %4, %cst_5 {dimension_numbers = #tpu.dot_dimension_numbers<[1], [0], [0], [1], [0, 0, 1, 1], [], []>} : vector<16x8xbf16>, vector<8x32xbf16>, vector<16x32xf32> -> vector<16x32xf32>
    %c0_6 = arith.constant 0 : index
    %c0_7 = arith.constant 0 : index
    %6 = vector.load %arg4[%c0_6, %c0_7] : memref<1x32xf32, #tpu.memory_space<vmem>>, vector<1x32xf32>
    %7 = vector.broadcast %6 : vector<1x32xf32> to vector<16x32xf32>
    %8 = arith.addf %5, %7 : vector<16x32xf32>
    %cst_8 = arith.constant 0.000000e+00 : f32
    %9 = vector.broadcast %cst_8 : f32 to vector<16x32xf32>
    %10 = arith.maximumf %8, %9 : vector<16x32xf32>
    %11 = arith.truncf %10 : vector<16x32xf32> to vector<16x32xbf16>
    %c0_9 = arith.constant 0 : index
    %c0_10 = arith.constant 0 : index
    %12 = vector.load %arg5[%c0_9, %c0_10] : memref<32x32xbf16, #tpu.memory_space<vmem>>, vector<32x32xbf16>
    %cst_11 = arith.constant dense<0.000000e+00> : vector<16x32xf32>
    %13 = tpu.matmul %11, %12, %cst_11 {dimension_numbers = #tpu.dot_dimension_numbers<[1], [0], [0], [1], [0, 0, 1, 1], [], []>} : vector<16x32xbf16>, vector<32x32xbf16>, vector<16x32xf32> -> vector<16x32xf32>
    %14 = arith.truncf %13 : vector<16x32xf32> to vector<16x32xbf16>
    %cst_12 = arith.constant dense<0.000000e+00> : vector<16x32xf32>
    %15 = tpu.matmul %0, %14, %cst_12 {dimension_numbers = #tpu.dot_dimension_numbers<[1], [0], [0], [1], [0, 0, 1, 1], [], []>} : vector<16x16xbf16>, vector<16x32xbf16>, vector<16x32xf32> -> vector<16x32xf32>
    %c0_13 = arith.constant 0 : index
    %c0_14 = arith.constant 0 : index
    %16 = vector.load %arg6[%c0_13, %c0_14] : memref<1x32xf32, #tpu.memory_space<vmem>>, vector<1x32xf32>
    %17 = vector.broadcast %16 : vector<1x32xf32> to vector<16x32xf32>
    %18 = arith.addf %15, %17 : vector<16x32xf32>
    %cst_15 = arith.constant 0.000000e+00 : f32
    %19 = vector.broadcast %cst_15 : f32 to vector<16x32xf32>
    %20 = arith.maximumf %18, %19 : vector<16x32xf32>
    %21 = arith.truncf %20 : vector<16x32xf32> to vector<16x32xbf16>
    %c0_16 = arith.constant 0 : index
    %c0_17 = arith.constant 0 : index
    %22 = vector.load %arg7[%c0_16, %c0_17] : memref<32x128xbf16, #tpu.memory_space<vmem>>, vector<32x128xbf16>
    %cst_18 = arith.constant dense<0.000000e+00> : vector<16x128xf32>
    %23 = tpu.matmul %21, %22, %cst_18 {dimension_numbers = #tpu.dot_dimension_numbers<[1], [0], [0], [1], [0, 0, 1, 1], [], []>} : vector<16x32xbf16>, vector<32x128xbf16>, vector<16x128xf32> -> vector<16x128xf32>
    %24 = arith.truncf %23 : vector<16x128xf32> to vector<16x128xbf16>
    %cst_19 = arith.constant dense<0.000000e+00> : vector<16x128xf32>
    %25 = tpu.matmul %0, %24, %cst_19 {dimension_numbers = #tpu.dot_dimension_numbers<[1], [0], [0], [1], [0, 0, 1, 1], [], []>} : vector<16x16xbf16>, vector<16x128xbf16>, vector<16x128xf32> -> vector<16x128xf32>
    %c0_20 = arith.constant 0 : index
    %c0_21 = arith.constant 0 : index
    %26 = vector.load %arg1[%c0_20, %c0_21] : memref<8x16xbf16, #tpu.memory_space<vmem>>, vector<8x16xbf16>
    %27 = arith.truncf %25 : vector<16x128xf32> to vector<16x128xbf16>
    %cst_22 = arith.constant dense<0.000000e+00> : vector<8x128xf32>
    %28 = tpu.matmul %26, %27, %cst_22 {dimension_numbers = #tpu.dot_dimension_numbers<[1], [0], [0], [1], [0, 0, 1, 1], [], []>} : vector<8x16xbf16>, vector<16x128xbf16>, vector<8x128xf32> -> vector<8x128xf32>
    %c0_23 = arith.constant 0 : index
    %c0_24 = arith.constant 0 : index
    %29 = vector.load %arg8[%c0_23, %c0_24] : memref<1x128xf32, #tpu.memory_space<vmem>>, vector<1x128xf32>
    %30 = vector.broadcast %29 : vector<1x128xf32> to vector<8x128xf32>
    %31 = arith.addf %28, %30 : vector<8x128xf32>
    %c0_25 = arith.constant 0 : index
    %c0_26 = arith.constant 0 : index
    %32 = vector.load %arg9[%c0_25, %c0_26] : memref<8x128xf32, #tpu.memory_space<vmem>>, vector<8x128xf32>
    tpu.vector_store %arg9[%c0_25, %c0_26], %31 {strides = array<i32>} : memref<8x128xf32, #tpu.memory_space<vmem>>, vector<8x128xf32>,
    return
  }
}

</mosaic_0001>

<llo_original>
// kernel: tpu_custom_call.1
$region0: #{tpu_custom_call.1}
  #allocation0 [shape = 'u32[]', space=smem, size = 0x4, offset = 0x4, fixed_abs, tag = 'smem constant byte address 0x4 - core index']
  #allocation1 [shape = 'u32[72,128]{1,0:T(1,128)}', space=vmem, size = 0x9000, scoped, tag = 'internal scratch']
  %s0 = inlined_call_operand.hbm [shape: bf16[16,16], index: 0, kind: input, shape index: {}]
  %s1 = inlined_call_operand.hbm [shape: bf16[8,16], index: 1, kind: input, shape index: {}]
  %s2 = inlined_call_operand.vmem [shape: bf16[16,8], index: 2, kind: input, shape index: {}]
  %s3 = inlined_call_operand.hbm [shape: bf16[8,32], index: 3, kind: input, shape index: {}]
  %s4 = inlined_call_operand.hbm [shape: f32[1,32], index: 4, kind: input, shape index: {}]
  %s5 = inlined_call_operand.vmem [shape: bf16[32,32], index: 5, kind: input, shape index: {}]
  %s6 = inlined_call_operand.vmem [shape: f32[1,32], index: 6, kind: input, shape index: {}]
  %s7 = inlined_call_operand.hbm [shape: bf16[32,128], index: 7, kind: input, shape index: {}]
  %s8 = inlined_call_operand.vmem [shape: f32[1,128], index: 8, kind: input, shape index: {}]
  %s9 = inlined_call_operand.hbm [shape: f32[8,128], index: 9, kind: output, shape index: {}]
  %s10 = sld [smem:[#allocation0]]
  $region66: #{tpu_custom_call.1} parent=0
    _
  %s12 = ssub.s32 1, %s10
  %s13 = scalar_select 0, %s12, %s10
  $region1: #{tpu_custom_call.1} parent=0
    #allocation2 [shape = 'u8[4096]{0}', space=vmem, size = 0x1000, scoped, tag = 'input window, operand 0, single buffered']
    #allocation3 [shape = 's32[1]{0}', space=sflag, size = 0x4, scoped, tag = 'scoped memory for tpu_custom_call.1']
    #allocation4 [shape = 's32[1]{0}', space=sflag, size = 0x4, scoped, tag = 'scoped memory for tpu_custom_call.1']
    #allocation5 [shape = 'u8[2048]{0}', space=vmem, size = 0x800, scoped, tag = 'input window, operand 1, single buffered']
    #allocation6 [shape = 's32[1]{0}', space=sflag, size = 0x4, scoped, tag = 'scoped memory for tpu_custom_call.1']
    #allocation7 [shape = 'u8[2048]{0}', space=vmem, size = 0x800, scoped, tag = 'input window, operand 3, single buffered']
    #allocation8 [shape = 'u8[512]{0}', space=vmem, size = 0x400, scoped, tag = 'input window, operand 4, single buffered']
    #allocation9 [shape = 's32[1]{0}', space=sflag, size = 0x4, scoped, tag = 'scoped memory for tpu_custom_call.1']
    #allocation10 [shape = 'u8[8192]{0}', space=vmem, size = 0x2000, scoped, tag = 'input window, operand 7, single buffered']
    #allocation11 [shape = 'u8[4096]{0}', space=vmem, size = 0x1000, scoped, tag = 'output window, operand 0, single buffered']
    %14 = vsyncpa [#allocation3], 0
    %15 = vsyncpa [#allocation6], 0
    %16 = vsyncpa [#allocation9], 0
    %17 = vsyncpa [#allocation4], 0
    // Predicated region
    $region2: #{tpu_custom_call.1} parent=1 // pred_check
      _
    $region3: #{tpu_custom_call.1} parent=1 // pred_check_branch
      %19 = sbr.rel (0) target = $region5
    $region4: #{tpu_custom_call.1} parent=1 // pred_region
      %21 = vsyncadd [#allocation3], 0
      %s22 = sshll.u32 %s0, 4
      %s23 = int_to_ptr.hbm [resolvable:$true] %s22
      %s24 = sshll.u32 [#allocation2], 4
      %s25 = int_to_ptr.vmem [resolvable:$true] %s24
      %30 = dma.hbm_to_vmem [thread:$0]  %s23, 128, %s25, [#allocation3], 64, 64, 4
    $region5: #{tpu_custom_call.1} parent=1 // pred_fallthru
      _
    // Predicated region
    $region6: #{tpu_custom_call.1} parent=1 // pred_check
      _
    $region7: #{tpu_custom_call.1} parent=1 // pred_check_branch
      %32 = sbr.rel (0) target = $region9
    $region8: #{tpu_custom_call.1} parent=1 // pred_region
      %34 = vsyncadd [#allocation6], 0
      %s36 = sshll.u32 %s1, 4
      %s37 = int_to_ptr.hbm [resolvable:$true] %s36
      %s38 = sshll.u32 [#allocation5], 4
      %s39 = int_to_ptr.vmem [resolvable:$true] %s38
      %41 = dma.hbm_to_vmem [thread:$0]  %s37, 64, %s39, [#allocation6]
    $region9: #{tpu_custom_call.1} parent=1 // pred_fallthru
      _
    // Predicated region
    $region10: #{tpu_custom_call.1} parent=1 // pred_check
      _
    $region11: #{tpu_custom_call.1} parent=1 // pred_check_branch
      %43 = sbr.rel (0) target = $region13
    $region12: #{tpu_custom_call.1} parent=1 // pred_region
      _
    $region13: #{tpu_custom_call.1} parent=1 // pred_fallthru
      _
    // Predicated region
    $region14: #{tpu_custom_call.1} parent=1 // pred_check
      _
    $region15: #{tpu_custom_call.1} parent=1 // pred_check_branch
      %45 = sbr.rel (0) target = $region17
    $region16: #{tpu_custom_call.1} parent=1 // pred_region
      %47 = vsyncadd [#allocation6], 0
      %s49 = sshll.u32 %s3, 4
      %s50 = int_to_ptr.hbm [resolvable:$true] %s49
      %s51 = sshll.u32 [#allocation7], 4
      %s52 = int_to_ptr.vmem [resolvable:$true] %s51
      %54 = dma.hbm_to_vmem [thread:$0]  %s50, 64, %s52, [#allocation6]
    $region17: #{tpu_custom_call.1} parent=1 // pred_fallthru
      _
    // Predicated region
    $region18: #{tpu_custom_call.1} parent=1 // pred_check
      _
    $region19: #{tpu_custom_call.1} parent=1 // pred_check_branch
      %56 = sbr.rel (0) target = $region21
    $region20: #{tpu_custom_call.1} parent=1 // pred_region
      %58 = vsyncadd [#allocation9], 0
      %s60 = sshll.u32 %s4, 4
      %s61 = int_to_ptr.hbm [resolvable:$true] %s60
      %s62 = sshll.u32 [#allocation8], 4
      %s63 = int_to_ptr.vmem [resolvable:$true] %s62
      %65 = dma.hbm_to_vmem [thread:$0]  %s61, 16, %s63, [#allocation9]
    $region21: #{tpu_custom_call.1} parent=1 // pred_fallthru
      _
    // Predicated region
    $region22: #{tpu_custom_call.1} parent=1 // pred_check
      _
    $region23: #{tpu_custom_call.1} parent=1 // pred_check_branch
      %67 = sbr.rel (0) target = $region25
    $region24: #{tpu_custom_call.1} parent=1 // pred_region
      _
    $region25: #{tpu_custom_call.1} parent=1 // pred_fallthru
      _
    // Predicated region
    $region26: #{tpu_custom_call.1} parent=1 // pred_check
      _
    $region27: #{tpu_custom_call.1} parent=1 // pred_check_branch
      %69 = sbr.rel (0) target = $region29
    $region28: #{tpu_custom_call.1} parent=1 // pred_region
      _
    $region29: #{tpu_custom_call.1} parent=1 // pred_fallthru
      _
    // Predicated region
    $region30: #{tpu_custom_call.1} parent=1 // pred_check
      _
    $region31: #{tpu_custom_call.1} parent=1 // pred_check_branch
      %71 = sbr.rel (0) target = $region33
    $region32: #{tpu_custom_call.1} parent=1 // pred_region
      %73 = vsyncadd [#allocation9], 0
      %s74 = sshll.u32 %s7, 4
      %s75 = int_to_ptr.hbm [resolvable:$true] %s74
      %s76 = sshll.u32 [#allocation10], 4
      %s77 = int_to_ptr.vmem [resolvable:$true] %s76
      %82 = dma.hbm_to_vmem [thread:$0]  %s75, 256, %s77, [#allocation9], 64, 64, 4
    $region33: #{tpu_custom_call.1} parent=1 // pred_fallthru
      _
    // Predicated region
    $region34: #{tpu_custom_call.1} parent=1 // pred_check
      _
    $region35: #{tpu_custom_call.1} parent=1 // pred_check_branch
      %84 = sbr.rel (0) target = $region37
    $region36: #{tpu_custom_call.1} parent=1 // pred_region
      _
    $region37: #{tpu_custom_call.1} parent=1 // pred_fallthru
      _
    // Predicated region
    $region38: #{tpu_custom_call.1} parent=1 // pred_check
      _
    $region39: #{tpu_custom_call.1} parent=1 // pred_check_branch
      %86 = sbr.rel (0) target = $region41
    $region40: #{tpu_custom_call.1} parent=1 // pred_region
      %88 = dma.done [#allocation3], 128
    $region41: #{tpu_custom_call.1} parent=1 // pred_fallthru
      _
    // Predicated region
    $region42: #{tpu_custom_call.1} parent=1 // pred_check
      _
    $region43: #{tpu_custom_call.1} parent=1 // pred_check_branch
      %90 = sbr.rel (0) target = $region45
    $region44: #{tpu_custom_call.1} parent=1 // pred_region
      %92 = dma.done [#allocation6], 64
    $region45: #{tpu_custom_call.1} parent=1 // pred_fallthru
      _
    // Predicated region
    $region46: #{tpu_custom_call.1} parent=1 // pred_check
      _
    $region47: #{tpu_custom_call.1} parent=1 // pred_check_branch
      %94 = sbr.rel (0) target = $region49
    $region48: #{tpu_custom_call.1} parent=1 // pred_region
      %96 = dma.done [#allocation6], 64
    $region49: #{tpu_custom_call.1} parent=1 // pred_fallthru
      _
    // Predicated region
    $region50: #{tpu_custom_call.1} parent=1 // pred_check
      _
    $region51: #{tpu_custom_call.1} parent=1 // pred_check_branch
      %98 = sbr.rel (0) target = $region53
    $region52: #{tpu_custom_call.1} parent=1 // pred_region
      %100 = dma.done [#allocation9], 16
    $region53: #{tpu_custom_call.1} parent=1 // pred_fallthru
      _
    // Predicated region
    $region54: #{tpu_custom_call.1} parent=1 // pred_check
      _
    $region55: #{tpu_custom_call.1} parent=1 // pred_check_branch
      %102 = sbr.rel (0) target = $region57
    $region56: #{tpu_custom_call.1} parent=1 // pred_region
      %104 = dma.done [#allocation9], 256
    $region57: #{tpu_custom_call.1} parent=1 // pred_fallthru
      _
    %v106 = vld [vmem:[#allocation2] sm:$0xf]
    %v107 = vld [vmem:[#allocation2 + $0x4] sm:$0xf]
    %v108 = vld [vmem:[%s2] sm:$0xf]
    %v109 = vld [vmem:[%s2 + $0x4] sm:$0xf]
    %v112 = vunpack.c.l.b16 %v106
    %v113 = vunpack.c.l.b16 %v107
    %v114 = vpack.c.b16 %v113, %v112
    %v117 = vunpack.c.l.b16 %v108
    %v118 = vunpack.c.l.b16 %v109
    %v119 = vpack.c.b16 %v118, %v117
    %vm121 = vcmask 130048
    %v123 = vsel %vm121, %v114, 0
    %125 = vmatpush.bf16.msra.mxu0 0
    %126 = vmatpush.bf16.msra.mxu0 0
    %127 = vmatpush.bf16.msra.mxu0 0
    %128 = vmatpush.bf16.msra.mxu0 0
    %129 = vmatpush.bf16.msra.mxu0 0
    %130 = vmatpush.bf16.msra.mxu0 0
    %131 = vmatpush.bf16.msra.mxu0 0
    %132 = vmatpush.bf16.msra.mxu0 %v119
    %133 = vmatmul.bf16.gmra.mxu0 %v123
    %v134 = vpop.f32.mrf.mxu0
    %v135 = vadd.f32 0.0, %v134
    %v136 = vpop.f32.mrf.mxu0
    %v137 = vadd.f32 0.0, %v136
    %138 = vdwg.mxu0
    %v139 = vpack.c.bf16 %v137, %v135
    %v140 = vld [vmem:[#allocation7] sm:$0xf]
    %v141 = vld [vmem:[#allocation8] sm:$0x1]
    %v143 = vperm.slane %v141, 0
    %vm145 = vcmask 64512
    %v147 = vsel %vm145, %v139, 0
    %vm149 = vcmask 1043456
    %v151 = vsel %vm149, %v140, 0
    %153 = vmatpush.bf16.msra.mxu0 0
    %154 = vmatpush.bf16.msra.mxu0 0
    %155 = vmatpush.bf16.msra.mxu0 0
    %156 = vmatpush.bf16.msra.mxu0 0
    %157 = vmatpush.bf16.msra.mxu0 0
    %158 = vmatpush.bf16.msra.mxu0 0
    %159 = vmatpush.bf16.msra.mxu0 0
    %160 = vmatpush.bf16.msra.mxu0 %v151
    %161 = vmatmul.bf16.gmra.mxu0 %v147
    %v162 = vpop.f32.mrf.mxu0
    %v163 = vadd.f32 %v143, %v162
    %v164 = vpop.f32.mrf.mxu0
    %v165 = vadd.f32 %v143, %v164
    %166 = vdwg.mxu0
    %v167 = vmax.f32 %v163, 0.0
    %v168 = vmax.f32 %v165, 0.0
    %v169 = vpack.c.bf16 %v168, %v167
    %v170 = vld [vmem:[%s5] sm:$0xf]
    %v171 = vld [vmem:[%s5 + $0x4] sm:$0xf]
    %v172 = vld [vmem:[%s5 + $0x8] sm:$0xf]
    %v173 = vld [vmem:[%s5 + $0xc] sm:$0xf]
    %v178 = vunpack.c.l.b16 %v170
    %v179 = vunpack.c.l.b16 %v171
    %v180 = vunpack.c.l.b16 %v172
    %v181 = vunpack.c.l.b16 %v173
    %v182 = vpack.c.b16 %v179, %v178
    %v183 = vpack.c.b16 %v181, %v180
    %vm186 = vcmask 261120
    %v188 = vsel %vm186, %v169, 0
    %190 = vmatpush.bf16.msra.mxu0 0
    %191 = vmatpush.bf16.msra.mxu0 0
    %192 = vmatpush.bf16.msra.mxu0 0
    %193 = vmatpush.bf16.msra.mxu0 0
    %194 = vmatpush.bf16.msra.mxu0 0
    %195 = vmatpush.bf16.msra.mxu0 0
    %196 = vmatpush.bf16.msra.mxu0 %v183
    %197 = vmatpush.bf16.msra.mxu0 %v182
    %198 = vmatmul.bf16.gmra.mxu0 %v188
    %v199 = vpop.f32.mrf.mxu0
    %v200 = vadd.f32 0.0, %v199
    %v201 = vpop.f32.mrf.mxu0
    %v202 = vadd.f32 0.0, %v201
    %203 = vdwg.mxu0
    %v204 = vpack.c.bf16 %v202, %v200
    %v205 = vld [vmem:[%s6] sm:$0x1]
    %v207 = vperm.slane %v205, 0
    %209 = vmatpush.bf16.msra.mxu0 0
    %210 = vmatpush.bf16.msra.mxu0 0
    %211 = vmatpush.bf16.msra.mxu0 0
    %212 = vmatpush.bf16.msra.mxu0 0
    %213 = vmatpush.bf16.msra.mxu0 0
    %214 = vmatpush.bf16.msra.mxu0 0
    %215 = vmatpush.bf16.msra.mxu0 0
    %216 = vmatpush.bf16.msra.mxu0 %v204
    %217 = vmatmul.bf16.gmra.mxu0 %v123
    %v218 = vpop.f32.mrf.mxu0
    %v219 = vadd.f32 %v207, %v218
    %v220 = vpop.f32.mrf.mxu0
    %v221 = vadd.f32 %v207, %v220
    %222 = vdwg.mxu0
    %v223 = vmax.f32 %v219, 0.0
    %v224 = vmax.f32 %v221, 0.0
    %v225 = vpack.c.bf16 %v224, %v223
    %v226 = vld [vmem:[#allocation10] sm:$0xf]
    %v227 = vld [vmem:[#allocation10 + $0x4] sm:$0xf]
    %v228 = vld [vmem:[#allocation10 + $0x8] sm:$0xf]
    %v229 = vld [vmem:[#allocation10 + $0xc] sm:$0xf]
    %v234 = vunpack.c.l.b16 %v226
    %v235 = vunpack.c.l.b16 %v227
    %v236 = vunpack.c.l.b16 %v228
    %v237 = vunpack.c.l.b16 %v229
    %v238 = vpack.c.b16 %v235, %v234
    %v239 = vpack.c.b16 %v237, %v236
    %v243 = vsel %vm186, %v225, 0
    %245 = vmatpush.bf16.msra.mxu0 0
    %246 = vmatpush.bf16.msra.mxu0 0
    %247 = vmatpush.bf16.msra.mxu0 0
    %248 = vmatpush.bf16.msra.mxu0 0
    %249 = vmatpush.bf16.msra.mxu0 0
    %250 = vmatpush.bf16.msra.mxu0 0
    %251 = vmatpush.bf16.msra.mxu0 %v239
    %252 = vmatpush.bf16.msra.mxu0 %v238
    %253 = vmatmul.bf16.gmra.mxu0 %v243
    %v254 = vpop.f32.mrf.mxu0
    %v255 = vadd.f32 0.0, %v254
    %v256 = vpop.f32.mrf.mxu0
    %v257 = vadd.f32 0.0, %v256
    %258 = vdwg.mxu0
    %v259 = vpack.c.bf16 %v257, %v255
    %260 = vmatpush.bf16.msra.mxu0 0
    %261 = vmatpush.bf16.msra.mxu0 0
    %262 = vmatpush.bf16.msra.mxu0 0
    %263 = vmatpush.bf16.msra.mxu0 0
    %264 = vmatpush.bf16.msra.mxu0 0
    %265 = vmatpush.bf16.msra.mxu0 0
    %266 = vmatpush.bf16.msra.mxu0 0
    %267 = vmatpush.bf16.msra.mxu0 %v259
    %268 = vmatmul.bf16.gmra.mxu0 %v123
    %v269 = vpop.f32.mrf.mxu0
    %v270 = vadd.f32 0.0, %v269
    %v271 = vpop.f32.mrf.mxu0
    %v272 = vadd.f32 0.0, %v271
    %273 = vdwg.mxu0
    %v274 = vld [vmem:[#allocation5] sm:$0xf]
    %v275 = vpack.c.bf16 %v272, %v270
    %v276 = vld [vmem:[%s8] sm:$0x1]
    %v278 = vperm.slane %v276, 0
    %v281 = vsel %vm121, %v274, 0
    %283 = vmatpush.bf16.msra.mxu0 0
    %284 = vmatpush.bf16.msra.mxu0 0
    %285 = vmatpush.bf16.msra.mxu0 0
    %286 = vmatpush.bf16.msra.mxu0 0
    %287 = vmatpush.bf16.msra.mxu0 0
    %288 = vmatpush.bf16.msra.mxu0 0
    %289 = vmatpush.bf16.msra.mxu0 0
    %290 = vmatpush.bf16.msra.mxu0 %v275
    %291 = vmatmul.bf16.gmra.mxu0 %v281
    %v292 = vpop.f32.mrf.mxu0
    %v293 = vadd.f32 %v278, %v292
    %v294 = vpop.f32.mrf.mxu0
    %295 = vdwg.mxu0
    %296 = vst [vmem:[#allocation11] sm:$0xff] %v293
    // Predicated region
    $region58: #{tpu_custom_call.1} parent=1 // pred_check
      _
    $region59: #{tpu_custom_call.1} parent=1 // pred_check_branch
      %298 = sbr.rel (0) target = $region61
    $region60: #{tpu_custom_call.1} parent=1 // pred_region
      %300 = vsyncadd [#allocation4], 0
      %s302 = sshll.u32 [#allocation11], 4
      %s303 = int_to_ptr.vmem [resolvable:$true] %s302
      %s304 = sshll.u32 %s9, 4
      %s305 = int_to_ptr.hbm [resolvable:$true] %s304
      %307 = dma.vmem_to_hbm [thread:$0]  %s303, 128, %s305, [#allocation4]
    $region61: #{tpu_custom_call.1} parent=1 // pred_fallthru
      _
    // Predicated region
    $region62: #{tpu_custom_call.1} parent=1 // pred_check
      _
    $region63: #{tpu_custom_call.1} parent=1 // pred_check_branch
      %309 = sbr.rel (0) target = $region65
    $region64: #{tpu_custom_call.1} parent=1 // pred_region
      %311 = dma.done [#allocation4], 128
    $region65: #{tpu_custom_call.1} parent=1 // pred_fallthru
      _
    %312 = vsyncpa [#allocation3], 1
    %313 = vsyncpa [#allocation6], 1
    %314 = vsyncpa [#allocation9], 1
    %315 = vsyncpa [#allocation4], 1

</llo_original>
